<compile_context>
chip_gen: v7x
topology: tpu7x:2x2x1
jax: 0.10.0
libtpu: 0.0.40
codegen_flags: <defaults>
</compile_context>

<pallas_src>
import jax
import jax.numpy as jnp
from jax.experimental import pallas as pl
from jax.experimental.pallas import tpu as pltpu

_LANE = 128
_SUBLANE = 8
_MAX_TILE_ROWS = 512       # 512 rows * 128 lanes = 64K batch elements / step


def _choose_tiling(batch):
    """Return (num_tiles, tile_rows, rows_pad) for a batch of `batch` lanes."""
    rows = max(1, -(-batch // _LANE))                 # ceil(batch / 128)
    num_tiles = -(-rows // _MAX_TILE_ROWS)            # ceil
    # Give megacore (v7x, 2 TCs) at least two grid steps when there is enough
    # work for two full-sublane tiles; tiny batches stay single-step.
    if num_tiles < 2 and rows >= 2 * _SUBLANE:
        num_tiles = 2
    tile_rows = -(-rows // num_tiles)                 # ceil
    tile_rows = ((tile_rows + _SUBLANE - 1) // _SUBLANE) * _SUBLANE
    rows_pad = num_tiles * tile_rows
    return num_tiles, tile_rows, rows_pad


def _segway_kernel(u_ref, x_ref, o_ref):
    # u_ref: (1,) f32 in SMEM (scalar prefetch, constant over the grid)
    # x_ref: (14, tile_rows, 128) f32 in VMEM  -- features on the leading axis
    # o_ref: (3,  tile_rows, 128) f32 in VMEM
    u = u_ref[0]
    # Fold the scalar control u into per-feature coefficients (scalar unit).
    a1 = -1.8 * u      # -c1 * u  ->  a1 * x[3]
    a3 = -10.9 * u     # -c3 * u  ->  a3 * x[5]
    e1 = 9.3 * u       #  d1 * u  ->  e1 * x[8]
    e3 = 38.6 * u      #  d3 * u  ->  e3 * x[10]

    y = x_ref[0]                       # (tile_rows, 128), sublane+lane dense
    x_dot = x_ref[1]
    y_dot = x_ref[2]

    cy = jnp.cos(y)
    sy = jnp.sin(y)
    ydot2 = y_dot * y_dot
    b = 24.7 * x_ref[13]

    num1 = (cy * (a1 * x_ref[3] + 11.5 * x_ref[4] * x_dot + 9.8 * sy)
            + a3 * x_ref[5] + 68.4 * x_ref[6] * x_dot
            - 1.2 * x_ref[7] * ydot2 * sy)
    num2 = ((e1 * x_ref[8] - 58.8 * x_ref[9] * x_dot) * cy
            + e3 * x_ref[10] - 234.5 * x_ref[11] * x_dot
            - sy * (208.3 * x_ref[12] + ydot2 * cy))

    # Exact division kept for parity with the PyTorch reference.
    o_ref[0] = y_dot
    o_ref[1] = num1 / (cy - b)
    o_ref[2] = num2 / (cy * cy - b)


def segway_forward_fm(x_fm, u=0.0, t=0.0):
    """Feature-major fast path: x_fm is (14, B) f32, returns (3, B) f32.

    No wrapper-side relayout: the (14, B) -> (14, rows, 128) reshape is a
    contiguous view and the pad is bounded to a few hundred lanes.
    """
    del t  # unused, matches the PyTorch signature
    nfeat, batch = x_fm.shape
    assert nfeat == 14, nfeat
    dtype = x_fm.dtype

    num_tiles, tile_rows, rows_pad = _choose_tiling(batch)
    b_pad = rows_pad * _LANE
    if b_pad != batch:
        # Zero lanes are numerically safe (cos(0)=1, b=0 -> denominators = 1).
        x_fm = jnp.pad(x_fm, ((0, 0), (0, b_pad - batch)))
    x3 = x_fm.reshape(14, rows_pad, _LANE)
    u_arr = jnp.asarray([u], dtype=jnp.float32)

    out3 = pl.pallas_call(
        _segway_kernel,
        out_shape=jax.ShapeDtypeStruct((3, rows_pad, _LANE), dtype),
        grid_spec=pltpu.PrefetchScalarGridSpec(
            num_scalar_prefetch=1,                       # u lives in SMEM
            grid=(num_tiles,),
            in_specs=[pl.BlockSpec((14, tile_rows, _LANE),
                                   lambda i, u_ref: (0, i, 0))],
            out_specs=pl.BlockSpec((3, tile_rows, _LANE),
                                   lambda i, u_ref: (0, i, 0)),
        ),
        compiler_params=pltpu.CompilerParams(
            dimension_semantics=("parallel",)),
    )(u_arr, x3)

    return out3.reshape(3, b_pad)[:, :batch]


def segway_forward(x, u=0.0, t=0.0):
    """PyTorch-compatible entry: x is (B, 14), returns (B, 3).

    NOTE: this path pays one HBM relayout for the (B,14)->(14,B) transpose
    (and one for the output).  Callers that can produce / consume the
    feature-major layout should use `segway_forward_fm` instead.
    """
    batch, nfeat = x.shape
    assert nfeat == 14, nfeat
    out_fm = segway_forward_fm(jnp.transpose(x), u, t)
    return jnp.transpose(out_fm)


def segway_forward_ref(x, u=0.0):
    """Pure-JAX reference (mirrors the PyTorch module) for correctness checks."""
    y, x_dot, y_dot = x[:, 0:1], x[:, 1:2], x[:, 2:3]
    c1, c2, c3, c4, c5 = (x[:, 3:4] * 1.8, x[:, 4:5] * 11.5, x[:, 5:6] * 10.9,
                          x[:, 6:7] * 68.4, x[:, 7:8] * 1.2)
    d1, d2, d3, d4, d5 = (x[:, 8:9] * 9.3, x[:, 9:10] * 58.8, x[:, 10:11] * 38.6,
                          x[:, 11:12] * 234.5, x[:, 12:13] * 208.3)
    b = x[:, 13:14] * 24.7
    cy, sy = jnp.cos(y), jnp.sin(y)
    col1 = (cy * (-c1 * u + c2 * x_dot + 9.8 * sy)
            - c3 * u + c4 * x_dot - c5 * y_dot * y_dot * sy) / (cy - b)
    col2 = ((d1 * u - d2 * x_dot) * cy + d3 * u - d4 * x_dot
            - sy * (d5 + y_dot * y_dot * cy)) / (cy * cy - b)
    return jnp.concatenate([y_dot, col1, col2], axis=1)


if __name__ == "__main__":
    # Small deterministic checks.
    key = jax.random.PRNGKey(0)
    k1, k2 = jax.random.split(key)

    B = 8
    x = jax.random.normal(k1, (B, 14), dtype=jnp.float32)
    u = 0.5
    out = jax.block_until_ready(segway_forward(x, u))
    ref = segway_forward_ref(x, u)
    assert out.shape == (B, 3), out.shape
    assert jnp.allclose(out, ref, rtol=1e-4, atol=1e-4), (out, ref)

    # Feature-major fast path + non-multiple-of-128 batch (padding path).
    B2 = 300
    x2 = jax.random.normal(k2, (B2, 14), dtype=jnp.float32)
    out2_fm = jax.block_until_ready(segway_forward_fm(jnp.transpose(x2), 0.0))
    ref2 = segway_forward_ref(x2, 0.0)
    assert out2_fm.shape == (3, B2), out2_fm.shape
    assert jnp.allclose(jnp.transpose(out2_fm), ref2, rtol=1e-4, atol=1e-4)

    print("KERNEL_OK")
</pallas_src>

<mosaic_0001>
module attributes {stable_mosaic.version = 11 : i64} {
  func.func @_segway_kernel(%arg0: i32, %arg1: memref<1xf32, #tpu.memory_space<smem>>, %arg2: memref<14x8x128xf32, #tpu.memory_space<vmem>>, %arg3: memref<3x8x128xf32, #tpu.memory_space<vmem>>) attributes {dimension_semantics = [#tpu.dimension_semantics<parallel>], iteration_bounds = array<i64: 1>, scalar_prefetch = 1 : i64, scratch_operands = 0 : i64, tpu.core_type = #tpu.core_type<tc>, window_params = [{transform_indices = @transform_0, window_bounds = array<i64: 14, 8, 128>}, {transform_indices = @transform_1, window_bounds = array<i64: 3, 8, 128>}]} {
    %c0 = arith.constant 0 : index
    %0 = memref.load %arg1[%c0] : memref<1xf32, #tpu.memory_space<smem>>
    %cst = arith.constant -1.800000e+00 : f32
    %1 = arith.mulf %cst, %0 : f32
    %cst_0 = arith.constant -1.090000e+01 : f32
    %2 = arith.mulf %cst_0, %0 : f32
    %cst_1 = arith.constant 9.300000e+00 : f32
    %3 = arith.mulf %cst_1, %0 : f32
    %cst_2 = arith.constant 3.860000e+01 : f32
    %4 = arith.mulf %cst_2, %0 : f32
    %c0_3 = arith.constant 0 : index
    %c0_4 = arith.constant 0 : index
    %c0_5 = arith.constant 0 : index
    %5 = vector.load %arg2[%c0_3, %c0_4, %c0_5] : memref<14x8x128xf32, #tpu.memory_space<vmem>>, vector<1x8x128xf32>
    %6 = vector.shape_cast %5 : vector<1x8x128xf32> to vector<8x128xf32>
    %c1 = arith.constant 1 : index
    %c0_6 = arith.constant 0 : index
    %c0_7 = arith.constant 0 : index
    %7 = vector.load %arg2[%c1, %c0_6, %c0_7] : memref<14x8x128xf32, #tpu.memory_space<vmem>>, vector<1x8x128xf32>
    %8 = vector.shape_cast %7 : vector<1x8x128xf32> to vector<8x128xf32>
    %c2 = arith.constant 2 : index
    %c0_8 = arith.constant 0 : index
    %c0_9 = arith.constant 0 : index
    %9 = vector.load %arg2[%c2, %c0_8, %c0_9] : memref<14x8x128xf32, #tpu.memory_space<vmem>>, vector<1x8x128xf32>
    %10 = vector.shape_cast %9 : vector<1x8x128xf32> to vector<8x128xf32>
    %11 = math.cos %6 : vector<8x128xf32>
    %12 = math.sin %6 : vector<8x128xf32>
    %13 = arith.mulf %10, %10 : vector<8x128xf32>
    %c13 = arith.constant 13 : index
    %c0_10 = arith.constant 0 : index
    %c0_11 = arith.constant 0 : index
    %14 = vector.load %arg2[%c13, %c0_10, %c0_11] : memref<14x8x128xf32, #tpu.memory_space<vmem>>, vector<1x8x128xf32>
    %15 = vector.shape_cast %14 : vector<1x8x128xf32> to vector<8x128xf32>
    %cst_12 = arith.constant 2.470000e+01 : f32
    %16 = vector.broadcast %cst_12 : f32 to vector<8x128xf32>
    %17 = arith.mulf %16, %15 : vector<8x128xf32>
    %c3 = arith.constant 3 : index
    %c0_13 = arith.constant 0 : index
    %c0_14 = arith.constant 0 : index
    %18 = vector.load %arg2[%c3, %c0_13, %c0_14] : memref<14x8x128xf32, #tpu.memory_space<vmem>>, vector<1x8x128xf32>
    %19 = vector.shape_cast %18 : vector<1x8x128xf32> to vector<8x128xf32>
    %20 = vector.broadcast %1 : f32 to vector<8x128xf32>
    %21 = arith.mulf %20, %19 : vector<8x128xf32>
    %c4 = arith.constant 4 : index
    %c0_15 = arith.constant 0 : index
    %c0_16 = arith.constant 0 : index
    %22 = vector.load %arg2[%c4, %c0_15, %c0_16] : memref<14x8x128xf32, #tpu.memory_space<vmem>>, vector<1x8x128xf32>
    %23 = vector.shape_cast %22 : vector<1x8x128xf32> to vector<8x128xf32>
    %cst_17 = arith.constant 1.150000e+01 : f32
    %24 = vector.broadcast %cst_17 : f32 to vector<8x128xf32>
    %25 = arith.mulf %24, %23 : vector<8x128xf32>
    %26 = arith.mulf %25, %8 : vector<8x128xf32>
    %27 = arith.addf %21, %26 : vector<8x128xf32>
    %cst_18 = arith.constant 9.800000e+00 : f32
    %28 = vector.broadcast %cst_18 : f32 to vector<8x128xf32>
    %29 = arith.mulf %28, %12 : vector<8x128xf32>
    %30 = arith.addf %27, %29 : vector<8x128xf32>
    %31 = arith.mulf %11, %30 : vector<8x128xf32>
    %c5 = arith.constant 5 : index
    %c0_19 = arith.constant 0 : index
    %c0_20 = arith.constant 0 : index
    %32 = vector.load %arg2[%c5, %c0_19, %c0_20] : memref<14x8x128xf32, #tpu.memory_space<vmem>>, vector<1x8x128xf32>
    %33 = vector.shape_cast %32 : vector<1x8x128xf32> to vector<8x128xf32>
    %34 = vector.broadcast %2 : f32 to vector<8x128xf32>
    %35 = arith.mulf %34, %33 : vector<8x128xf32>
    %36 = arith.addf %31, %35 : vector<8x128xf32>
    %c6 = arith.constant 6 : index
    %c0_21 = arith.constant 0 : index
    %c0_22 = arith.constant 0 : index
    %37 = vector.load %arg2[%c6, %c0_21, %c0_22] : memref<14x8x128xf32, #tpu.memory_space<vmem>>, vector<1x8x128xf32>
    %38 = vector.shape_cast %37 : vector<1x8x128xf32> to vector<8x128xf32>
    %cst_23 = arith.constant 6.840000e+01 : f32
    %39 = vector.broadcast %cst_23 : f32 to vector<8x128xf32>
    %40 = arith.mulf %39, %38 : vector<8x128xf32>
    %41 = arith.mulf %40, %8 : vector<8x128xf32>
    %42 = arith.addf %36, %41 : vector<8x128xf32>
    %c7 = arith.constant 7 : index
    %c0_24 = arith.constant 0 : index
    %c0_25 = arith.constant 0 : index
    %43 = vector.load %arg2[%c7, %c0_24, %c0_25] : memref<14x8x128xf32, #tpu.memory_space<vmem>>, vector<1x8x128xf32>
    %44 = vector.shape_cast %43 : vector<1x8x128xf32> to vector<8x128xf32>
    %cst_26 = arith.constant 1.200000e+00 : f32
    %45 = vector.broadcast %cst_26 : f32 to vector<8x128xf32>
    %46 = arith.mulf %45, %44 : vector<8x128xf32>
    %47 = arith.mulf %46, %13 : vector<8x128xf32>
    %48 = arith.mulf %47, %12 : vector<8x128xf32>
    %49 = arith.subf %42, %48 : vector<8x128xf32>
    %c8 = arith.constant 8 : index
    %c0_27 = arith.constant 0 : index
    %c0_28 = arith.constant 0 : index
    %50 = vector.load %arg2[%c8, %c0_27, %c0_28] : memref<14x8x128xf32, #tpu.memory_space<vmem>>, vector<1x8x128xf32>
    %51 = vector.shape_cast %50 : vector<1x8x128xf32> to vector<8x128xf32>
    %52 = vector.broadcast %3 : f32 to vector<8x128xf32>
    %53 = arith.mulf %52, %51 : vector<8x128xf32>
    %c9 = arith.constant 9 : index
    %c0_29 = arith.constant 0 : index
    %c0_30 = arith.constant 0 : index
    %54 = vector.load %arg2[%c9, %c0_29, %c0_30] : memref<14x8x128xf32, #tpu.memory_space<vmem>>, vector<1x8x128xf32>
    %55 = vector.shape_cast %54 : vector<1x8x128xf32> to vector<8x128xf32>
    %cst_31 = arith.constant 5.880000e+01 : f32
    %56 = vector.broadcast %cst_31 : f32 to vector<8x128xf32>
    %57 = arith.mulf %56, %55 : vector<8x128xf32>
    %58 = arith.mulf %57, %8 : vector<8x128xf32>
    %59 = arith.subf %53, %58 : vector<8x128xf32>
    %60 = arith.mulf %59, %11 : vector<8x128xf32>
    %c10 = arith.constant 10 : index
    %c0_32 = arith.constant 0 : index
    %c0_33 = arith.constant 0 : index
    %61 = vector.load %arg2[%c10, %c0_32, %c0_33] : memref<14x8x128xf32, #tpu.memory_space<vmem>>, vector<1x8x128xf32>
    %62 = vector.shape_cast %61 : vector<1x8x128xf32> to vector<8x128xf32>
    %63 = vector.broadcast %4 : f32 to vector<8x128xf32>
    %64 = arith.mulf %63, %62 : vector<8x128xf32>
    %65 = arith.addf %60, %64 : vector<8x128xf32>
    %c11 = arith.constant 11 : index
    %c0_34 = arith.constant 0 : index
    %c0_35 = arith.constant 0 : index
    %66 = vector.load %arg2[%c11, %c0_34, %c0_35] : memref<14x8x128xf32, #tpu.memory_space<vmem>>, vector<1x8x128xf32>
    %67 = vector.shape_cast %66 : vector<1x8x128xf32> to vector<8x128xf32>
    %cst_36 = arith.constant 2.345000e+02 : f32
    %68 = vector.broadcast %cst_36 : f32 to vector<8x128xf32>
    %69 = arith.mulf %68, %67 : vector<8x128xf32>
    %70 = arith.mulf %69, %8 : vector<8x128xf32>
    %71 = arith.subf %65, %70 : vector<8x128xf32>
    %c12 = arith.constant 12 : index
    %c0_37 = arith.constant 0 : index
    %c0_38 = arith.constant 0 : index
    %72 = vector.load %arg2[%c12, %c0_37, %c0_38] : memref<14x8x128xf32, #tpu.memory_space<vmem>>, vector<1x8x128xf32>
    %73 = vector.shape_cast %72 : vector<1x8x128xf32> to vector<8x128xf32>
    %cst_39 = arith.constant 2.083000e+02 : f32
    %74 = vector.broadcast %cst_39 : f32 to vector<8x128xf32>
    %75 = arith.mulf %74, %73 : vector<8x128xf32>
    %76 = arith.mulf %13, %11 : vector<8x128xf32>
    %77 = arith.addf %75, %76 : vector<8x128xf32>
    %78 = arith.mulf %12, %77 : vector<8x128xf32>
    %79 = arith.subf %71, %78 : vector<8x128xf32>
    %c0_40 = arith.constant 0 : index
    %c0_41 = arith.constant 0 : index
    %c0_42 = arith.constant 0 : index
    %80 = vector.load %arg3[%c0_40, %c0_41, %c0_42] : memref<3x8x128xf32, #tpu.memory_space<vmem>>, vector<1x8x128xf32>
    %81 = vector.shape_cast %80 : vector<1x8x128xf32> to vector<8x128xf32>
    %82 = vector.shape_cast %10 : vector<8x128xf32> to vector<1x8x128xf32>
    tpu.vector_store %arg3[%c0_40, %c0_41, %c0_42], %82 {strides = array<i32>} : memref<3x8x128xf32, #tpu.memory_space<vmem>>, vector<1x8x128xf32>,
    %83 = arith.subf %11, %17 : vector<8x128xf32>
    %84 = arith.divf %49, %83 : vector<8x128xf32>
    %c1_43 = arith.constant 1 : index
    %c0_44 = arith.constant 0 : index
    %c0_45 = arith.constant 0 : index
    %85 = vector.load %arg3[%c1_43, %c0_44, %c0_45] : memref<3x8x128xf32, #tpu.memory_space<vmem>>, vector<1x8x128xf32>
    %86 = vector.shape_cast %85 : vector<1x8x128xf32> to vector<8x128xf32>
    %87 = vector.shape_cast %84 : vector<8x128xf32> to vector<1x8x128xf32>
    tpu.vector_store %arg3[%c1_43, %c0_44, %c0_45], %87 {strides = array<i32>} : memref<3x8x128xf32, #tpu.memory_space<vmem>>, vector<1x8x128xf32>,
    %88 = arith.mulf %11, %11 : vector<8x128xf32>
    %89 = arith.subf %88, %17 : vector<8x128xf32>
    %90 = arith.divf %79, %89 : vector<8x128xf32>
    %c2_46 = arith.constant 2 : index
    %c0_47 = arith.constant 0 : index
    %c0_48 = arith.constant 0 : index
    %91 = vector.load %arg3[%c2_46, %c0_47, %c0_48] : memref<3x8x128xf32, #tpu.memory_space<vmem>>, vector<1x8x128xf32>
    %92 = vector.shape_cast %91 : vector<1x8x128xf32> to vector<8x128xf32>
    %93 = vector.shape_cast %90 : vector<8x128xf32> to vector<1x8x128xf32>
    tpu.vector_store %arg3[%c2_46, %c0_47, %c0_48], %93 {strides = array<i32>} : memref<3x8x128xf32, #tpu.memory_space<vmem>>, vector<1x8x128xf32>,
    return
  }
  func.func @transform_0(%arg0: i32, %arg1: memref<1xf32, #tpu.memory_space<smem>>) -> (i32, i32, i32) {
    %c0_i32 = arith.constant 0 : i32
    %c0_i32_0 = arith.constant 0 : i32
    %c0_i32_1 = arith.constant 0 : i32
    return %c0_i32, %arg0, %c0_i32_0 : i32, i32, i32
  }
  func.func @transform_1(%arg0: i32, %arg1: memref<1xf32, #tpu.memory_space<smem>>) -> (i32, i32, i32) {
    %c0_i32 = arith.constant 0 : i32
    %c0_i32_0 = arith.constant 0 : i32
    %c0_i32_1 = arith.constant 0 : i32
    return %c0_i32, %arg0, %c0_i32_0 : i32, i32, i32
  }
}

</mosaic_0001>

<llo_original>
// kernel: tpu_custom_call.1
$region0: #{tpu_custom_call.1}
  #allocation0 [shape = 'u32[]', space=smem, size = 0x4, offset = 0x4, fixed_abs, tag = 'smem constant byte address 0x4 - core index']
  #allocation1 [shape = 'u32[144,128]{1,0:T(1,128)}', space=vmem, size = 0x12000, scoped, tag = 'internal scratch']
  #allocation2 [shape = 's32[1]{0}', space=sflag, size = 0x4, scoped, tag = 'scoped memory for tpu_custom_call.1']
  #allocation3 [shape = 'f32[1]{0:T(128)S(6)}', space=smem, size = 0x200, scoped, tag = 'prefetched SMEM operand 0']
  %s0 = inlined_call_operand.<no memory space> [shape: f32[1], index: 0, kind: input, shape index: {}]
  %s1 = inlined_call_operand.hbm [shape: f32[14,8,128], index: 1, kind: input, shape index: {}]
  %s2 = inlined_call_operand.hbm [shape: f32[3,8,128], index: 2, kind: output, shape index: {}]
  %s3 = sld [smem:[#allocation0]]
  $region18: #{tpu_custom_call.1} parent=0
    _
  %s5 = ssub.s32 1, %s3
  %s6 = scalar_select 0, %s5, %s3
  %7 = sst [smem:[#allocation3]] %s0
  $region1: #{tpu_custom_call.1} parent=0
    #allocation4 [shape = 'u8[57344]{0}', space=vmem, size = 0xe000, scoped, tag = 'input window, operand 1, single buffered']
    #allocation5 [shape = 's32[1]{0}', space=sflag, size = 0x4, scoped, tag = 'scoped memory for tpu_custom_call.1']
    #allocation6 [shape = 's32[1]{0}', space=sflag, size = 0x4, scoped, tag = 'scoped memory for tpu_custom_call.1']
    #allocation7 [shape = 'u8[12288]{0}', space=vmem, size = 0x3000, scoped, tag = 'output window, operand 0, single buffered']
    %8 = vsyncpa [#allocation5], 0
    %9 = vsyncpa [#allocation6], 0
    // Predicated region
    $region2: #{tpu_custom_call.1} parent=1 // pred_check
      _
    $region3: #{tpu_custom_call.1} parent=1 // pred_check_branch
      %11 = sbr.rel (0) target = $region5
    $region4: #{tpu_custom_call.1} parent=1 // pred_region
      %s13 = ssub.s32 1792, 1792
      %14 = vsyncadd [#allocation5], %s13
      %s15 = sshll.u32 [#allocation4], 4
      %s16 = int_to_ptr.vmem [resolvable:$true] %s15
      %21 = dma.hbm_to_vmem [thread:$0]  %s1, 1792, %s16, [#allocation5], 128, 128, 8
    $region5: #{tpu_custom_call.1} parent=1 // pred_fallthru
      _
    // Predicated region
    $region6: #{tpu_custom_call.1} parent=1 // pred_check
      _
    $region7: #{tpu_custom_call.1} parent=1 // pred_check_branch
      %23 = sbr.rel (0) target = $region9
    $region8: #{tpu_custom_call.1} parent=1 // pred_region
      %24 = dma.done [#allocation5], 1792
    $region9: #{tpu_custom_call.1} parent=1 // pred_fallthru
      _
    %s25 = sld [smem:[#allocation3]]
    %s26 = smul.f32 %s25, -1.8
    %s27 = smul.f32 %s25, -10.9
    %s28 = smul.f32 %s25, 9.3
    %s29 = smul.f32 %s25, 38.6
    %v30 = vld [vmem:[#allocation4] sm:$0xff]
    %s31 = scalar_lea.vmem [#allocation4], 8
    %v32 = vld [vmem:[%s31] sm:$0xff]
    %s33 = scalar_lea.vmem [#allocation4], 16
    %v34 = vld [vmem:[%s33] sm:$0xff]
    %v35 = vand.u32 2147483647, %v30
    %vm36 = vcmp.le.f32.partialorder %v35, 0.7853982
    %vm37 = vcmp.lt.s32.totalorder %v30, 0
    %v38 = vand.u32 %v30, 2139095040
    %v39 = vshrl.u32 %v38, 23
    %v40 = vsub.s32 %v39, 127
    %v41 = vand.u32 2147483647, %v30
    %v42 = vand.u32 %v41, 8388607
    %v43 = vor.u32 %v42, 8388608
    %v44 = vsub.s32 0, %v43
    %v45 = vadd.s32 %v40, 1
    %vm46 = vcmp.gt.s32.totalorder %v45, 0
    %v47 = vsel %vm46, %v45, 0
    %v48 = vshrl.u32 %v47, 5
    %v49 = vand.u32 %v47, 31
    %v50 = vsub.s32 32, %v49
    %v51 = vshrl.u32 683565275, %v50
    %v52 = vshll.u32 683565275, %v49
    %v53 = vshrl.u32 2475754826, %v50
    %v54 = vor.u32 %v52, %v53
    %v55 = vshll.u32 2475754826, %v49
    %v56 = vshrl.u32 2131351028, %v50
    %v57 = vor.u32 %v55, %v56
    %v58 = vshll.u32 2131351028, %v49
    %v59 = vshrl.u32 2102212464, %v50
    %v60 = vor.u32 %v58, %v59
    %v61 = vshll.u32 2102212464, %v49
    %v62 = vshrl.u32 920167782, %v50
    %v63 = vor.u32 %v61, %v62
    %v64 = vshll.u32 920167782, %v49
    %v65 = vshrl.u32 1326507024, %v50
    %v66 = vor.u32 %v64, %v65
    %vm67 = vcmp.lt.s32.totalorder %v48, 1
    %vm68 = vcmp.lt.s32.totalorder %v48, 2
    %vm69 = vcmp.lt.s32.totalorder %v48, 3
    %vm70 = vcmp.lt.s32.totalorder %v48, 4
    %v71 = vsel %vm67, %v51, %v54
    %v72 = vsel %vm70, %v60, 2102212464
    %v73 = vsel %vm69, %v57, %v72
    %v74 = vsel %vm68, %v71, %v73
    %v75 = vsel %vm67, %v54, %v57
    %v76 = vsel %vm70, %v63, 920167782
    %v77 = vsel %vm69, %v60, %v76
    %v78 = vsel %vm68, %v75, %v77
    %v79 = vsel %vm67, %v57, %v60
    %v80 = vsel %vm70, %v66, 1326507024
    %v81 = vsel %vm69, %v63, %v80
    %v82 = vsel %vm68, %v79, %v81
    %v83 = vshll.u32 %v43, 8
    %v84 = vmul.u32.u64.compose %v83, %v82
    %v85 = vextract.low.u32 %v84
    %v86 = vextract.high.u32 %v84
    %v87 = vmul.u32.u64.compose %v83, %v78
    %v88 = vextract.low.u32 %v87
    %v89 = vextract.high.u32 %v87
    %v90 = vmul.u32 %v83, %v74
    %v91 = vadd.s32 %v86, %v88
    %vm92 = vc.u32 %v86, %v88
    %v93 = vadd.s32 %v89, 1
    %v94 = vsel %vm92, %v93, %v89
    %v95 = vadd.s32 %v90, %v94
    %v96 = vadd.s32 %v95, 536870912
    %v97 = vshrl.u32 %v96, 30
    %v98 = vshll.u32 %v97, 30
    %v99 = vsub.s32 %v95, %v98
    %vm100 = vcmp.lt.s32.totalorder %v99, 0
    %v101 = vsub.s32 0, %v99
    %v102 = vsel %vm100, %v101, %v99
    %v103 = vclz %v102
    %v104 = vsub.s32 %v103, 2
    %vm105 = vcmp.gt.s32.totalorder 0, %v104
    %v106 = vsel %vm105, 0, %v104
    %v107 = vsub.s32 32, %v106
    %v108 = vshll.u32 %v99, %v106
    %v109 = vshrl.u32 %v91, %v107
    %v110 = vor.u32 %v108, %v109
    %v111 = vsub.s32 4294967266, %v106
    %v112 = vadd.s32 %v111, 127
    %v113 = vshll.u32 %v112, 23
    %v114 = vor.u32 4788187, %v113
    %v115 = vand.u32 2147483647, %v114
    %v117 = vcvt.s32.f32 %v110
    %v118 = vmul.f32 %v117, %v115
    %v119 = vxor.u32 %v118, 2147483648
    %v120 = vsel %vm37, %v119, %v118
    %v121 = vsub.s32 4, %v97
    %v122 = vsel %vm37, %v121, %v97
    %v123 = vsel %vm36, %v30, %v120
    %v124 = vsel %vm36, 0, %v122
    %v125 = vcosq.f32.pop %v123
    %v126 = vsinq.f32.pop %v123
    %vm127 = vweird.f32 %v30
    %v128 = vand.u32 %v124, 3
    %vm129 = vcmp.lt.s32.totalorder %v128, 2
    %vm130 = vcmp.eq.s32.totalorder %v128, 0
    %v131 = vxor.u32 %v126, 2147483648
    %v132 = vsel %vm130, %v125, %v131
    %vm133 = vcmp.eq.s32.totalorder %v128, 2
    %v134 = vxor.u32 %v125, 2147483648
    %v135 = vsel %vm133, %v134, %v126
    %v136 = vsel %vm129, %v132, %v135
    %v137 = vsel %vm127, nan, %v136
    %v138 = vand.u32 2147483647, %v30
    %vm139 = vcmp.le.f32.partialorder %v138, 0.7853982
    %vm140 = vcmp.lt.s32.totalorder %v30, 0
    %v141 = vand.u32 %v30, 2139095040
    %v142 = vshrl.u32 %v141, 23
    %v143 = vsub.s32 %v142, 127
    %v144 = vand.u32 2147483647, %v30
    %v145 = vand.u32 %v144, 8388607
    %v146 = vor.u32 %v145, 8388608
    %v147 = vsub.s32 0, %v146
    %v148 = vadd.s32 %v143, 1
    %vm149 = vcmp.gt.s32.totalorder %v148, 0
    %v150 = vsel %vm149, %v148, 0
    %v151 = vshrl.u32 %v150, 5
    %v152 = vand.u32 %v150, 31
    %v153 = vsub.s32 32, %v152
    %v154 = vshrl.u32 683565275, %v153
    %v155 = vshll.u32 683565275, %v152
    %v156 = vshrl.u32 2475754826, %v153
    %v157 = vor.u32 %v155, %v156
    %v158 = vshll.u32 2475754826, %v152
    %v159 = vshrl.u32 2131351028, %v153
    %v160 = vor.u32 %v158, %v159
    %v161 = vshll.u32 2131351028, %v152
    %v162 = vshrl.u32 2102212464, %v153
    %v163 = vor.u32 %v161, %v162
    %v164 = vshll.u32 2102212464, %v152
    %v165 = vshrl.u32 920167782, %v153
    %v166 = vor.u32 %v164, %v165
    %v167 = vshll.u32 920167782, %v152
    %v168 = vshrl.u32 1326507024, %v153
    %v169 = vor.u32 %v167, %v168
    %vm170 = vcmp.lt.s32.totalorder %v151, 1
    %vm171 = vcmp.lt.s32.totalorder %v151, 2
    %vm172 = vcmp.lt.s32.totalorder %v151, 3
    %vm173 = vcmp.lt.s32.totalorder %v151, 4
    %v174 = vsel %vm170, %v154, %v157
    %v175 = vsel %vm173, %v163, 2102212464
    %v176 = vsel %vm172, %v160, %v175
    %v177 = vsel %vm171, %v174, %v176
    %v178 = vsel %vm170, %v157, %v160
    %v179 = vsel %vm173, %v166, 920167782
    %v180 = vsel %vm172, %v163, %v179
    %v181 = vsel %vm171, %v178, %v180
    %v182 = vsel %vm170, %v160, %v163
    %v183 = vsel %vm173, %v169, 1326507024
    %v184 = vsel %vm172, %v166, %v183
    %v185 = vsel %vm171, %v182, %v184
    %v186 = vshll.u32 %v146, 8
    %v187 = vmul.u32.u64.compose %v186, %v185
    %v188 = vextract.low.u32 %v187
    %v189 = vextract.high.u32 %v187
    %v190 = vmul.u32.u64.compose %v186, %v181
    %v191 = vextract.low.u32 %v190
    %v192 = vextract.high.u32 %v190
    %v193 = vmul.u32 %v186, %v177
    %v194 = vadd.s32 %v189, %v191
    %vm195 = vc.u32 %v189, %v191
    %v196 = vadd.s32 %v192, 1
    %v197 = vsel %vm195, %v196, %v192
    %v198 = vadd.s32 %v193, %v197
    %v199 = vadd.s32 %v198, 536870912
    %v200 = vshrl.u32 %v199, 30
    %v201 = vshll.u32 %v200, 30
    %v202 = vsub.s32 %v198, %v201
    %vm203 = vcmp.lt.s32.totalorder %v202, 0
    %v204 = vsub.s32 0, %v202
    %v205 = vsel %vm203, %v204, %v202
    %v206 = vclz %v205
    %v207 = vsub.s32 %v206, 2
    %vm208 = vcmp.gt.s32.totalorder 0, %v207
    %v209 = vsel %vm208, 0, %v207
    %v210 = vsub.s32 32, %v209
    %v211 = vshll.u32 %v202, %v209
    %v212 = vshrl.u32 %v194, %v210
    %v213 = vor.u32 %v211, %v212
    %v214 = vsub.s32 4294967266, %v209
    %v215 = vadd.s32 %v214, 127
    %v216 = vshll.u32 %v215, 23
    %v217 = vor.u32 4788187, %v216
    %v218 = vand.u32 2147483647, %v217
    %v220 = vcvt.s32.f32 %v213
    %v221 = vmul.f32 %v220, %v218
    %v222 = vxor.u32 %v221, 2147483648
    %v223 = vsel %vm140, %v222, %v221
    %v224 = vsub.s32 4, %v200
    %v225 = vsel %vm140, %v224, %v200
    %v226 = vsel %vm139, %v30, %v223
    %v227 = vsel %vm139, 0, %v225
    %v228 = vcosq.f32.pop %v226
    %v229 = vsinq.f32.pop %v226
    %vm230 = vweird.f32 %v30
    %v231 = vadd.s32 %v227, 3
    %v232 = vand.u32 %v231, 3
    %vm233 = vcmp.lt.s32.totalorder %v232, 2
    %vm234 = vcmp.eq.s32.totalorder %v232, 0
    %v235 = vxor.u32 %v229, 2147483648
    %v236 = vsel %vm234, %v228, %v235
    %vm237 = vcmp.eq.s32.totalorder %v232, 2
    %v238 = vxor.u32 %v228, 2147483648
    %v239 = vsel %vm237, %v238, %v229
    %v240 = vsel %vm233, %v236, %v239
    %v241 = vsel %vm230, nan, %v240
    %v242 = vmul.f32 %v34, %v34
    %s243 = scalar_lea.vmem [#allocation4], 104
    %v244 = vld [vmem:[%s243] sm:$0xff]
    %v245 = vmul.f32 %v244, 24.7
    %s246 = scalar_lea.vmem [#allocation4], 24
    %v247 = vld [vmem:[%s246] sm:$0xff]
    %v248 = vstv %s26
    %v249 = vmul.f32 %v248, %v247
    %s250 = scalar_lea.vmem [#allocation4], 32
    %v251 = vld [vmem:[%s250] sm:$0xff]
    %v252 = vmul.f32 %v251, 11.5
    %v253 = vmul.f32 %v252, %v32
    %v254 = vadd.f32 %v249, %v253
    %v255 = vmul.f32 %v241, 9.8
    %v256 = vadd.f32 %v254, %v255
    %v257 = vmul.f32 %v137, %v256
    %s258 = scalar_lea.vmem [#allocation4], 40
    %v259 = vld [vmem:[%s258] sm:$0xff]
    %v260 = vstv %s27
    %v261 = vmul.f32 %v260, %v259
    %v262 = vadd.f32 %v257, %v261
    %s263 = scalar_lea.vmem [#allocation4], 48
    %v264 = vld [vmem:[%s263] sm:$0xff]
    %v265 = vmul.f32 %v264, 68.4
    %v266 = vmul.f32 %v265, %v32
    %v267 = vadd.f32 %v262, %v266
    %s268 = scalar_lea.vmem [#allocation4], 56
    %v269 = vld [vmem:[%s268] sm:$0xff]
    %v270 = vmul.f32 %v269, 1.2
    %v271 = vmul.f32 %v270, %v242
    %v272 = vmul.f32 %v271, %v241
    %v273 = vsub.f32 %v267, %v272
    %s274 = scalar_lea.vmem [#allocation4], 64
    %v275 = vld [vmem:[%s274] sm:$0xff]
    %v276 = vstv %s28
    %v277 = vmul.f32 %v276, %v275
    %s278 = scalar_lea.vmem [#allocation4], 72
    %v279 = vld [vmem:[%s278] sm:$0xff]
    %v280 = vmul.f32 %v279, 58.8
    %v281 = vmul.f32 %v280, %v32
    %v282 = vsub.f32 %v277, %v281
    %v283 = vmul.f32 %v282, %v137
    %s284 = scalar_lea.vmem [#allocation4], 80
    %v285 = vld [vmem:[%s284] sm:$0xff]
    %v286 = vstv %s29
    %v287 = vmul.f32 %v286, %v285
    %v288 = vadd.f32 %v283, %v287
    %s289 = scalar_lea.vmem [#allocation4], 88
    %v290 = vld [vmem:[%s289] sm:$0xff]
    %v291 = vmul.f32 %v290, 234.5
    %v292 = vmul.f32 %v291, %v32
    %v293 = vsub.f32 %v288, %v292
    %s294 = scalar_lea.vmem [#allocation4], 96
    %v295 = vld [vmem:[%s294] sm:$0xff]
    %v296 = vmul.f32 %v295, 208.3
    %v297 = vmul.f32 %v242, %v137
    %v298 = vadd.f32 %v296, %v297
    %v299 = vmul.f32 %v241, %v298
    %v300 = vsub.f32 %v293, %v299
    %301 = vst [vmem:[#allocation7] sm:$0xff] %v34
    %v302 = vsub.f32 %v137, %v245
    %v303 = vrcp.pop %v302
    %v304 = vmul.f32 %v273, %v303
    %s305 = scalar_lea.vmem [#allocation7], 8
    %306 = vst [vmem:[%s305] sm:$0xff] %v304
    %v307 = vmul.f32 %v137, %v137
    %v308 = vsub.f32 %v307, %v245
    %v309 = vrcp.pop %v308
    %v310 = vmul.f32 %v300, %v309
    %s311 = scalar_lea.vmem [#allocation7], 16
    %312 = vst [vmem:[%s311] sm:$0xff] %v310
    // Predicated region
    $region10: #{tpu_custom_call.1} parent=1 // pred_check
      _
    $region11: #{tpu_custom_call.1} parent=1 // pred_check_branch
      %314 = sbr.rel (0) target = $region13
    $region12: #{tpu_custom_call.1} parent=1 // pred_region
      %s316 = ssub.s32 384, 384
      %317 = vsyncadd [#allocation6], %s316
      %s318 = sshll.u32 [#allocation7], 4
      %s319 = int_to_ptr.vmem [resolvable:$true] %s318
      %324 = dma.vmem_to_hbm [thread:$0]  %s319, 384, %s2, [#allocation6], 128, 128, 8
    $region13: #{tpu_custom_call.1} parent=1 // pred_fallthru
      _
    // Predicated region
    $region14: #{tpu_custom_call.1} parent=1 // pred_check
      _
    $region15: #{tpu_custom_call.1} parent=1 // pred_check_branch
      %326 = sbr.rel (0) target = $region17
    $region16: #{tpu_custom_call.1} parent=1 // pred_region
      %327 = dma.done [#allocation6], 384
    $region17: #{tpu_custom_call.1} parent=1 // pred_fallthru
      _
    %328 = vsyncpa [#allocation5], 1
    %329 = vsyncpa [#allocation6], 1

</llo_original>
